<compile_context>
chip_gen: v5e
topology: v5e:2x2
jax: 0.10.0
libtpu: 0.0.40
codegen_flags: <defaults>
</compile_context>

<pallas_src>
import functools

import numpy as np
import jax
import jax.numpy as jnp
from jax import lax
from jax.experimental import pallas as pl
from jax.experimental.pallas import tpu as pltpu


def get_random_rectangle_inside(image_shape, height_ratio, width_ratio, rng):
    """Same semantics as the PyTorch helper, with an explicit numpy RNG."""
    image_height = image_shape[2]
    image_width = image_shape[3]
    remaining_height = int(height_ratio * image_height)
    remaining_width = int(width_ratio * image_width)
    if remaining_height == image_height:
        height_start = 0
    else:
        height_start = int(rng.integers(0, image_height - remaining_height))
    if remaining_width == image_width:
        width_start = 0
    else:
        width_start = int(rng.integers(0, image_width - remaining_width))
    return (height_start, height_start + remaining_height,
            width_start, width_start + remaining_width)


# ---------------------------------------------------------------------------
# Tuning helpers
# ---------------------------------------------------------------------------

def _default_block_target_bytes():
    """Generation-aware block-byte target (per-step overhead amortization)."""
    try:
        kind = jax.devices()[0].device_kind.lower()
    except Exception:  # pragma: no cover - defensive
        return 2 << 20
    if "v7" in kind:
        return 4 << 20       # 3.2 TB/s HBM: amortize the ~0.35us/step cost
    if "v6" in kind:
        return 2 << 20
    if "v5" in kind:
        return 1 << 20       # 16 MiB default scoped VMEM; bigger buys little
    return 2 << 20


def _vmem_limit(block_bytes):
    """Scoped-VMEM limit: 2 double-buffers for input + output, plus headroom.

    Capped at 48 MiB so it stays under the smallest physical VMEM (v7x 64 MiB).
    """
    return int(min(48 << 20, max(16 << 20, 4 * block_bytes + (8 << 20))))


def _sublane_packing(itemsize):
    """Native sublane packing: 8 for 4-byte, 16 for 2-byte, 32 for 1-byte."""
    return max(8, 32 // max(int(itemsize), 1))


def _choose_block_flat(B, HW, itemsize, packing, target_bytes, lane_cap=4096):
    """(tb, t_hw) for the flattened (B, HW) slab.  HW is a multiple of 128."""
    t_hw = min(HW, lane_cap)                       # multiple of 128 (or full)
    rows = target_bytes // max(t_hw * itemsize, 1)
    if rows >= B or B <= packing:
        tb = B                                     # full dim is always legal
    else:
        tb = min(B, max(packing, (rows // packing) * packing))
    return tb, t_hw


def _choose_block_3d(B, H, W, itemsize, packing, target_bytes):
    """(tb, th, tw) for the (B, H, W) layout.  W is a multiple of 128."""
    tw = min(W, 512)                               # multiple of 128 (or full)
    th = min(H, 32) if H % 8 == 0 else H           # multiple of 8, or full H
    rows = target_bytes // max(th * tw * itemsize, 1)
    if rows >= B or B <= packing:
        tb = B
    else:
        tb = min(B, max(packing, (rows // packing) * packing))
    return tb, th, tw


# ---------------------------------------------------------------------------
# Kernels
# ---------------------------------------------------------------------------

def _crop_kernel_flat(bounds_ref, x_ref, o_ref, *, width, t_hw, w_pow2):
    """One (tb, t_hw) tile of the flattened (N*C, H*W) image.

    bounds_ref: SMEM int32[6] = (h_start, h_end, w_start, w_end, t_lo, t_hi).
    Tiles whose flat-index range misses [h_start*W, h_end*W) are entirely
    outside the crop: write zeros without reading x_ref (its block index was
    clamped in the index_map, so no new HBM fetch happened for this step).
    Padded / out-of-range lanes get `inside == False` -> 0 and are discarded
    by Pallas on writeback, so no garbage propagates.
    """
    t = pl.program_id(1)
    h_start = bounds_ref[0]
    h_end = bounds_ref[1]
    w_start = bounds_ref[2]
    w_end = bounds_ref[3]

    tile_lo = t * t_hw
    flat_lo = h_start * width
    flat_hi = h_end * width
    intersects = jnp.logical_and(tile_lo < flat_hi, tile_lo + t_hw > flat_lo)

    @pl.when(jnp.logical_not(intersects))
    def _():
        o_ref[...] = jnp.zeros_like(o_ref)

    @pl.when(intersects)
    def _():
        x = x_ref[...]                                        # (tb, t_hw)
        flat = tile_lo + lax.broadcasted_iota(jnp.int32, (1, t_hw), 1)
        # Row test as a flat-range compare (no integer divide).
        inside_h = (flat >= flat_lo) & (flat < flat_hi)
        if w_pow2:
            w = jnp.bitwise_and(flat, width - 1)
        else:
            w = lax.rem(flat, width)
        inside = inside_h & (w >= w_start) & (w < w_end)      # (1, t_hw)
        half = jnp.asarray(0.5, x.dtype)
        zero = jnp.asarray(0.0, x.dtype)
        o_ref[...] = jnp.where(inside, x * half + half, zero)  # ((x+1)/2)*mask


def _crop_kernel_3d(bounds_ref, x_ref, o_ref, *, th, tw):
    """One (tb, th, tw) tile of the (N*C, H, W) image.

    bounds_ref: SMEM int32[8] =
      (h_start, h_end, w_start, w_end, ht_lo, ht_hi, wt_lo, wt_hi).
    Tiles outside the crop rectangle in either H or W write zeros without
    reading (both tile indices were clamped in the index_map).
    """
    hi = pl.program_id(1)
    wi = pl.program_id(2)
    h_start = bounds_ref[0]
    h_end = bounds_ref[1]
    w_start = bounds_ref[2]
    w_end = bounds_ref[3]

    h_lo = hi * th
    w_lo = wi * tw
    intersects = ((h_lo < h_end) & (h_lo + th > h_start) &
                  (w_lo < w_end) & (w_lo + tw > w_start))

    @pl.when(jnp.logical_not(intersects))
    def _():
        o_ref[...] = jnp.zeros_like(o_ref)

    @pl.when(intersects)
    def _():
        x = x_ref[...]                                        # (tb, th, tw)
        hh = h_lo + lax.broadcasted_iota(jnp.int32, (1, th, tw), 1)
        ww = w_lo + lax.broadcasted_iota(jnp.int32, (1, th, tw), 2)
        inside = ((hh >= h_start) & (hh < h_end) &
                  (ww >= w_start) & (ww < w_end))
        half = jnp.asarray(0.5, x.dtype)
        zero = jnp.asarray(0.0, x.dtype)
        o_ref[...] = jnp.where(inside, x * half + half, zero)


# ---------------------------------------------------------------------------
# Wrappers
# ---------------------------------------------------------------------------

def _crop_flat(image, rect, itemsize, packing, target_bytes):
    N, C, H, W = image.shape
    h_start, h_end, w_start, w_end = rect
    B, HW = N * C, H * W
    x2 = image.reshape(B, HW)

    # Pad the lane dim to a multiple of 128 so stores stay unmasked.
    HW_pad = ((HW + 127) // 128) * 128
    if HW_pad != HW:
        x2 = jnp.pad(x2, ((0, 0), (0, HW_pad - HW)))

    tb, t_hw = _choose_block_flat(B, HW_pad, itemsize, packing, target_bytes)
    gb, gt = pl.cdiv(B, tb), pl.cdiv(HW_pad, t_hw)

    # HW-tiles containing crop data lie in [t_lo, t_hi]; the flat crop span
    # [h_start*W, h_end*W) is contiguous.  Out-of-range tiles are clamped in
    # the input index_map so their HBM reads are skipped (block reuse).
    if h_end > h_start:
        t_lo = min((h_start * W) // t_hw, gt - 1)
        t_hi = min(max((h_end * W - 1) // t_hw, t_lo), gt - 1)
    else:
        t_lo = t_hi = 0

    bounds = jnp.asarray([h_start, h_end, w_start, w_end, t_lo, t_hi],
                         dtype=jnp.int32)
    kernel = functools.partial(_crop_kernel_flat, width=W, t_hw=t_hw,
                               w_pow2=(W & (W - 1)) == 0)
    block_bytes = tb * t_hw * itemsize

    out2 = pl.pallas_call(
        kernel,
        out_shape=jax.ShapeDtypeStruct((B, HW_pad), image.dtype),
        grid_spec=pltpu.PrefetchScalarGridSpec(
            num_scalar_prefetch=1,
            grid=(gb, gt),
            in_specs=[pl.BlockSpec(
                (tb, t_hw),
                lambda b, t, bnd: (b, jnp.clip(t, bnd[4], bnd[5])))],
            out_specs=pl.BlockSpec((tb, t_hw), lambda b, t, bnd: (b, t)),
        ),
        compiler_params=pltpu.CompilerParams(
            dimension_semantics=("parallel", "parallel"),
            vmem_limit_bytes=_vmem_limit(block_bytes)),
    )(bounds, x2)

    if HW_pad != HW:
        out2 = out2[:, :HW]
    return out2.reshape(N, C, H, W)


def _crop_3d(image, rect, itemsize, packing, target_bytes):
    N, C, H, W = image.shape
    h_start, h_end, w_start, w_end = rect
    B = N * C
    x3 = image.reshape(B, H, W)

    tb, th, tw = _choose_block_3d(B, H, W, itemsize, packing, target_bytes)
    gb, gh, gw = pl.cdiv(B, tb), pl.cdiv(H, th), pl.cdiv(W, tw)

    if h_end > h_start:
        ht_lo = min(h_start // th, gh - 1)
        ht_hi = min(max((h_end - 1) // th, ht_lo), gh - 1)
    else:
        ht_lo = ht_hi = 0
    if w_end > w_start:
        wt_lo = min(w_start // tw, gw - 1)
        wt_hi = min(max((w_end - 1) // tw, wt_lo), gw - 1)
    else:
        wt_lo = wt_hi = 0

    bounds = jnp.asarray([h_start, h_end, w_start, w_end,
                          ht_lo, ht_hi, wt_lo, wt_hi], dtype=jnp.int32)
    kernel = functools.partial(_crop_kernel_3d, th=th, tw=tw)
    block_bytes = tb * th * tw * itemsize

    out3 = pl.pallas_call(
        kernel,
        out_shape=jax.ShapeDtypeStruct((B, H, W), image.dtype),
        grid_spec=pltpu.PrefetchScalarGridSpec(
            num_scalar_prefetch=1,
            grid=(gb, gh, gw),
            in_specs=[pl.BlockSpec(
                (tb, th, tw),
                lambda b, h, w, bnd: (b,
                                      jnp.clip(h, bnd[4], bnd[5]),
                                      jnp.clip(w, bnd[6], bnd[7])))],
            out_specs=pl.BlockSpec((tb, th, tw),
                                   lambda b, h, w, bnd: (b, h, w)),
        ),
        compiler_params=pltpu.CompilerParams(
            dimension_semantics=("parallel", "parallel", "parallel"),
            vmem_limit_bytes=_vmem_limit(block_bytes)),
    )(bounds, x3)
    return out3.reshape(N, C, H, W)


def crop_forward(image_and_cover, height_ratio, width_ratio, rng,
                 *, block_target_bytes=None):
    """JAX/Pallas equivalent of Crop.forward."""
    image, cover_image = image_and_cover   # cover image unused, as in PyTorch
    del cover_image
    N, C, H, W = image.shape

    rect = get_random_rectangle_inside(image.shape, height_ratio, width_ratio,
                                       rng)

    if block_target_bytes is None:
        block_target_bytes = _default_block_target_bytes()

    itemsize = jnp.dtype(image.dtype).itemsize
    packing = _sublane_packing(itemsize)

    if W % 128 == 0:
        # Lane-dense natively; 2-D clamp skips out-of-crop rows AND columns.
        return _crop_3d(image, rect, itemsize, packing, block_target_bytes)
    # Small-W images: flatten to a lane-dense slab, clamp along the flat axis.
    return _crop_flat(image, rect, itemsize, packing, block_target_bytes)


def crop_reference(image, h_start, h_end, w_start, w_end):
    """Pure-JAX reference matching the PyTorch semantics."""
    mask = jnp.zeros_like(image)
    mask = mask.at[:, :, h_start:h_end, w_start:w_end].set(1.0)
    return ((image + 1.0) / 2.0) * mask


if __name__ == "__main__":
    height_ratio, width_ratio = 0.5, 0.5

    # --- Test 1: nominal WFormer shape (single grid step, flat path) ---
    N, C, H, W = 2, 4, 16, 16
    key = jax.random.PRNGKey(0)
    k_img, k_cov = jax.random.split(key)
    image = jax.random.normal(k_img, (N, C, H, W), dtype=jnp.float32)
    cover = jax.random.normal(k_cov, (N, C, H, W), dtype=jnp.float32)

    rng1 = np.random.default_rng(0)
    rect1 = get_random_rectangle_inside(image.shape, height_ratio, width_ratio,
                                        np.random.default_rng(0))
    out1 = jax.block_until_ready(
        crop_forward((image, cover), height_ratio, width_ratio, rng1))
    ref1 = crop_reference(image, *rect1)
    np.testing.assert_allclose(np.asarray(out1), np.asarray(ref1),
                               atol=1e-6, rtol=1e-6)

    # --- Test 2: flat multi-tile path (W < 128), exercises read-skip clamp ---
    img2 = jax.random.normal(jax.random.PRNGKey(1), (2, 4, 256, 64),
                             dtype=jnp.float32)
    rng2 = np.random.default_rng(3)
    rect2 = get_random_rectangle_inside(img2.shape, height_ratio, width_ratio,
                                        np.random.default_rng(3))
    out2 = jax.block_until_ready(
        crop_forward((img2, img2), height_ratio, width_ratio, rng2,
                     block_target_bytes=1 << 16))
    ref2 = crop_reference(img2, *rect2)
    np.testing.assert_allclose(np.asarray(out2), np.asarray(ref2),
                               atol=1e-6, rtol=1e-6)

    # --- Test 3: 3-D path (W % 128 == 0), exercises both H and W clamps ---
    img3 = jax.random.normal(jax.random.PRNGKey(2), (1, 2, 128, 1024),
                             dtype=jnp.float32)
    rng3 = np.random.default_rng(7)
    rect3 = get_random_rectangle_inside(img3.shape, height_ratio, width_ratio,
                                        np.random.default_rng(7))
    out3 = jax.block_until_ready(
        crop_forward((img3, img3), height_ratio, width_ratio, rng3,
                     block_target_bytes=1 << 20))
    ref3 = crop_reference(img3, *rect3)
    np.testing.assert_allclose(np.asarray(out3), np.asarray(ref3),
                               atol=1e-6, rtol=1e-6)

    print("KERNEL_OK")
</pallas_src>

<mosaic_0001>
module attributes {stable_mosaic.version = 11 : i64} {
  func.func @_crop_kernel_flat(%arg0: i32, %arg1: i32, %arg2: memref<6xi32, #tpu.memory_space<smem>>, %arg3: memref<8x256xf32, #tpu.memory_space<vmem>>, %arg4: memref<8x256xf32, #tpu.memory_space<vmem>>) attributes {dimension_semantics = [#tpu.dimension_semantics<parallel>, #tpu.dimension_semantics<parallel>], iteration_bounds = array<i64: 1, 1>, scalar_prefetch = 1 : i64, scratch_operands = 0 : i64, tpu.core_type = #tpu.core_type<tc>, window_params = [{transform_indices = @transform_0, window_bounds = array<i64: 8, 256>}, {transform_indices = @transform_1, window_bounds = array<i64: 8, 256>}]} {
    %c0 = arith.constant 0 : index
    %0 = memref.load %arg2[%c0] : memref<6xi32, #tpu.memory_space<smem>>
    %c1 = arith.constant 1 : index
    %1 = memref.load %arg2[%c1] : memref<6xi32, #tpu.memory_space<smem>>
    %c2 = arith.constant 2 : index
    %2 = memref.load %arg2[%c2] : memref<6xi32, #tpu.memory_space<smem>>
    %c3 = arith.constant 3 : index
    %3 = memref.load %arg2[%c3] : memref<6xi32, #tpu.memory_space<smem>>
    %c256_i32 = arith.constant 256 : i32
    %4 = arith.muli %arg1, %c256_i32 : i32
    %c16_i32 = arith.constant 16 : i32
    %5 = arith.muli %0, %c16_i32 : i32
    %c16_i32_0 = arith.constant 16 : i32
    %6 = arith.muli %1, %c16_i32_0 : i32
    %7 = arith.cmpi slt, %4, %6 : i32
    %c256_i32_1 = arith.constant 256 : i32
    %8 = arith.addi %4, %c256_i32_1 : i32
    %9 = arith.cmpi sgt, %8, %5 : i32
    %10 = arith.andi %7, %9 : i1
    %true = arith.constant true
    %11 = arith.xori %10, %true : i1
    %12 = arith.extui %11 : i1 to i32
    %c0_i32 = arith.constant 0 : i32
    %13 = arith.cmpi ne, %12, %c0_i32 : i32
    scf.if %13 {
      %cst = arith.constant 0.000000e+00 : f32
      %16 = vector.broadcast %cst : f32 to vector<8x256xf32>
      %c0_3 = arith.constant 0 : index
      %c0_4 = arith.constant 0 : index
      %17 = vector.load %arg4[%c0_3, %c0_4] : memref<8x256xf32, #tpu.memory_space<vmem>>, vector<8x256xf32>
      tpu.vector_store %arg4[%c0_3, %c0_4], %16 {strides = array<i32>} : memref<8x256xf32, #tpu.memory_space<vmem>>, vector<8x256xf32>,
    } else {
    }
    %14 = arith.extui %10 : i1 to i32
    %c0_i32_2 = arith.constant 0 : i32
    %15 = arith.cmpi ne, %14, %c0_i32_2 : i32
    scf.if %15 {
      %c0_3 = arith.constant 0 : index
      %c0_4 = arith.constant 0 : index
      %16 = vector.load %arg3[%c0_3, %c0_4] : memref<8x256xf32, #tpu.memory_space<vmem>>, vector<8x256xf32>
      %17 = tpu.iota {dimensions = array<i32: 1>} : vector<1x256xi32>
      %18 = vector.broadcast %4 : i32 to vector<1x256xi32>
      %19 = arith.addi %18, %17 : vector<1x256xi32>
      %20 = vector.broadcast %5 : i32 to vector<1x256xi32>
      %21 = arith.cmpi sge, %19, %20 : vector<1x256xi32>
      %22 = vector.broadcast %6 : i32 to vector<1x256xi32>
      %23 = arith.cmpi slt, %19, %22 : vector<1x256xi32>
      %24 = arith.andi %21, %23 : vector<1x256xi1>
      %c15_i32 = arith.constant 15 : i32
      %25 = vector.broadcast %c15_i32 : i32 to vector<1x256xi32>
      %26 = arith.andi %19, %25 : vector<1x256xi32>
      %27 = vector.broadcast %2 : i32 to vector<1x256xi32>
      %28 = arith.cmpi sge, %26, %27 : vector<1x256xi32>
      %29 = arith.andi %24, %28 : vector<1x256xi1>
      %30 = vector.broadcast %3 : i32 to vector<1x256xi32>
      %31 = arith.cmpi slt, %26, %30 : vector<1x256xi32>
      %32 = arith.andi %29, %31 : vector<1x256xi1>
      %cst = arith.constant 5.000000e-01 : f32
      %33 = vector.broadcast %cst : f32 to vector<8x256xf32>
      %34 = arith.mulf %16, %33 : vector<8x256xf32>
      %cst_5 = arith.constant 5.000000e-01 : f32
      %35 = vector.broadcast %cst_5 : f32 to vector<8x256xf32>
      %36 = arith.addf %34, %35 : vector<8x256xf32>
      %cst_6 = arith.constant 0.000000e+00 : f32
      %37 = vector.shape_cast %32 : vector<1x256xi1> to vector<1x256xi1>
      %38 = vector.broadcast %37 : vector<1x256xi1> to vector<8x256xi1>
      %39 = vector.broadcast %cst_6 : f32 to vector<8x256xf32>
      %40 = arith.select %38, %36, %39 : vector<8x256xi1>, vector<8x256xf32>
      %c0_7 = arith.constant 0 : index
      %c0_8 = arith.constant 0 : index
      %41 = vector.load %arg4[%c0_7, %c0_8] : memref<8x256xf32, #tpu.memory_space<vmem>>, vector<8x256xf32>
      tpu.vector_store %arg4[%c0_7, %c0_8], %40 {strides = array<i32>} : memref<8x256xf32, #tpu.memory_space<vmem>>, vector<8x256xf32>,
    } else {
    }
    return
  }
  func.func @transform_0(%arg0: i32, %arg1: i32, %arg2: memref<6xi32, #tpu.memory_space<smem>>) -> (i32, i32) {
    %c4 = arith.constant 4 : index
    %0 = memref.load %arg2[%c4] : memref<6xi32, #tpu.memory_space<smem>>
    %c5 = arith.constant 5 : index
    %1 = memref.load %arg2[%c5] : memref<6xi32, #tpu.memory_space<smem>>
    %2 = arith.maxsi %0, %arg1 : i32
    %3 = arith.minsi %1, %2 : i32
    %c0_i32 = arith.constant 0 : i32
    return %arg0, %3 : i32, i32
  }
  func.func @transform_1(%arg0: i32, %arg1: i32, %arg2: memref<6xi32, #tpu.memory_space<smem>>) -> (i32, i32) {
    %c0_i32 = arith.constant 0 : i32
    return %arg0, %arg1 : i32, i32
  }
}

</mosaic_0001>

<llo_original>
// kernel: tpu_custom_call.1
$region0: #{tpu_custom_call.1}
  #allocation0 [shape = 'u32[]', space=smem, size = 0x4, offset = 0x4, fixed_abs, tag = 'smem constant byte address 0x4 - core index']
  #allocation1 [shape = 'u32[72,128]{1,0:T(1,128)}', space=vmem, size = 0x9000, scoped, tag = 'internal scratch']
  #allocation2 [shape = 's32[1]{0}', space=sflag, size = 0x4, scoped, tag = 'scoped memory for tpu_custom_call.1']
  #allocation3 [shape = 'u8[512]{0}', space=smem, size = 0x200, scoped, tag = 'prefetched SMEM operand 0']
  %s0 = inlined_call_operand.hbm [shape: s32[6], index: 0, kind: input, shape index: {}]
  %s1 = inlined_call_operand.hbm [shape: f32[8,256], index: 1, kind: input, shape index: {}]
  %s2 = inlined_call_operand.hbm [shape: f32[8,256], index: 2, kind: output, shape index: {}]
  %s3 = sld [smem:[#allocation0]]
  $region26: #{tpu_custom_call.1} parent=0
    _
  %s5 = ssub.s32 1, %s3
  %s6 = scalar_select 0, %s5, %s3
  %s8 = sshll.u32 %s0, 4
  %s9 = int_to_ptr.hbm [resolvable:$true] %s8
  %11 = dma.hbm_to_smem %s9, 16, [#allocation3], [#allocation2]
  %13 = dma.done [#allocation2], 16
  %14 = sfence
  $region1: #{tpu_custom_call.1} parent=0
    #allocation4 [shape = 'u8[8192]{0}', space=vmem, size = 0x2000, scoped, tag = 'input window, operand 1, single buffered']
    #allocation5 [shape = 's32[1]{0}', space=sflag, size = 0x4, scoped, tag = 'scoped memory for tpu_custom_call.1']
    #allocation6 [shape = 's32[1]{0}', space=sflag, size = 0x4, scoped, tag = 'scoped memory for tpu_custom_call.1']
    #allocation7 [shape = 'u8[8192]{0}', space=vmem, size = 0x2000, scoped, tag = 'output window, operand 0, single buffered']
    %15 = vsyncpa [#allocation5], 0
    %16 = vsyncpa [#allocation6], 0
    // Predicated region
    $region2: #{tpu_custom_call.1} parent=1 // pred_check
      _
    $region3: #{tpu_custom_call.1} parent=1 // pred_check_branch
      %18 = sbr.rel (0) target = $region5
    $region4: #{tpu_custom_call.1} parent=1 // pred_region
      %s19 = sld [smem:[#allocation3 + $0x4]]
      %s20 = sld [smem:[#allocation3 + $0x5]]
      %p21 = scmp.gt.s32.totalorder %s19, 0
      %s22 = scalar_select %p21, %s19, 0
      %p23 = scmp.lt.s32.totalorder %s20, %s22
      %s24 = scalar_select %p23, %s20, %s22
      %s25 = smul.u32 2, %s24
      %27 = vsyncadd [#allocation5], 0
      %s28 = smul.addr %s25, 8
      %s29 = scalar_lea.hbm %s1, %s28
      %s31 = sshll.u32 %s29, 4
      %s32 = int_to_ptr.hbm [resolvable:$true] %s31
      %s33 = sshll.u32 [#allocation4], 4
      %s34 = int_to_ptr.vmem [resolvable:$true] %s33
      %36 = dma.hbm_to_vmem [thread:$0]  %s32, 256, %s34, [#allocation5]
    $region5: #{tpu_custom_call.1} parent=1 // pred_fallthru
      _
    // Predicated region
    $region6: #{tpu_custom_call.1} parent=1 // pred_check
      _
    $region7: #{tpu_custom_call.1} parent=1 // pred_check_branch
      %38 = sbr.rel (0) target = $region9
    $region8: #{tpu_custom_call.1} parent=1 // pred_region
      %40 = dma.done [#allocation5], 256
    $region9: #{tpu_custom_call.1} parent=1 // pred_fallthru
      _
    %s41 = sld [smem:[#allocation3 + $0x4]]
    %s42 = sld [smem:[#allocation3 + $0x5]]
    %p43 = scmp.gt.s32.totalorder %s41, 0
    %s44 = scalar_select %p43, %s41, 0
    %p45 = scmp.lt.s32.totalorder %s42, %s44
    %s46 = scalar_select %p45, %s42, %s44
    %s47 = smul.u32 2, %s46
    %s48 = sld [smem:[#allocation3]]
    %s49 = sld [smem:[#allocation3 + $0x1]]
    %s50 = sld [smem:[#allocation3 + $0x2]]
    %s51 = sld [smem:[#allocation3 + $0x3]]
    %s52 = smul.u32 0, 256
    %s53 = smul.u32 %s48, 16
    %s54 = smul.u32 %s49, 16
    %p55 = scmp.lt.s32.totalorder %s52, %s54
    %s56 = sadd.s32 %s52, 256
    %p57 = scmp.gt.s32.totalorder %s56, %s53
    %p58 = pnand %p55, %p57
    %p59 = pneg %p58
    // Predicated region
    $region10: #{tpu_custom_call.1} parent=1 // pred_check
      _
    $region11: #{tpu_custom_call.1} parent=1 // pred_check_branch
      %61 = sbr.rel (%p58) target = $region13
    $region12: #{tpu_custom_call.1} parent=1 // pred_region
      %v62 = vld [vmem:[#allocation4] sm:$0xff]
      %v63 = vld [vmem:[#allocation4 + $0x8] sm:$0xff]
      %v64 = vlaneseq
      %v65 = vand.u32 %v64, 127
      %v66 = vadd.s32 %v65, 128
      %v67 = vstv %s52
      %v68 = vadd.s32 %v67, %v65
      %v69 = vadd.s32 %v67, %v66
      %v70 = vstv %s53
      %vm71 = vcmp.ge.s32.totalorder %v68, %v70
      %vm72 = vcmp.ge.s32.totalorder %v69, %v70
      %v73 = vstv %s54
      %vm74 = vcmp.lt.s32.totalorder %v68, %v73
      %vm75 = vcmp.lt.s32.totalorder %v69, %v73
      %vm76 = vmand %vm71, %vm74
      %vm77 = vmand %vm72, %vm75
      %v78 = vand.u32 %v68, 15
      %v79 = vand.u32 %v69, 15
      %v80 = vstv %s50
      %vm81 = vcmp.ge.s32.totalorder %v78, %v80
      %vm82 = vcmp.ge.s32.totalorder %v79, %v80
      %vm83 = vmand %vm76, %vm81
      %vm84 = vmand %vm77, %vm82
      %v85 = vstv %s51
      %vm86 = vcmp.lt.s32.totalorder %v78, %v85
      %vm87 = vcmp.lt.s32.totalorder %v79, %v85
      %vm88 = vmand %vm83, %vm86
      %vm89 = vmand %vm84, %vm87
      %v90 = vmul.f32 %v62, 0.5
      %v91 = vmul.f32 %v63, 0.5
      %v92 = vadd.f32 %v90, 0.5
      %v93 = vadd.f32 %v91, 0.5
      %v94 = vsel %vm88, 1, 0
      %v95 = vsel %vm89, 1, 0
      %vm96 = vcmp.eq.s32.totalorder %v94, 1
      %vm97 = vcmp.eq.s32.totalorder %v95, 1
      %v98 = vsel %vm96, %v92, 0.0
      %v99 = vsel %vm97, %v93, 0.0
      %100 = vst [vmem:[#allocation7] sm:$0xff] %v98
      %101 = vst [vmem:[#allocation7 + $0x8] sm:$0xff] %v99
    $region13: #{tpu_custom_call.1} parent=1 // pred_fallthru
      _
    // Predicated region
    $region14: #{tpu_custom_call.1} parent=1 // pred_check
      %p102 = pneg %p58
    $region15: #{tpu_custom_call.1} parent=1 // pred_check_branch
      %104 = sbr.rel (%p102) target = $region17
    $region16: #{tpu_custom_call.1} parent=1 // pred_region
      %105 = vst [vmem:[#allocation7] sm:$0xff] 0.0
      %106 = vst [vmem:[#allocation7 + $0x8] sm:$0xff] 0.0
    $region17: #{tpu_custom_call.1} parent=1 // pred_fallthru
      _
    // Predicated region
    $region18: #{tpu_custom_call.1} parent=1 // pred_check
      _
    $region19: #{tpu_custom_call.1} parent=1 // pred_check_branch
      %108 = sbr.rel (0) target = $region21
    $region20: #{tpu_custom_call.1} parent=1 // pred_region
      %110 = vsyncadd [#allocation6], 0
      %s112 = sshll.u32 [#allocation7], 4
      %s113 = int_to_ptr.vmem [resolvable:$true] %s112
      %s114 = sshll.u32 %s2, 4
      %s115 = int_to_ptr.hbm [resolvable:$true] %s114
      %117 = dma.vmem_to_hbm [thread:$0]  %s113, 256, %s115, [#allocation6]
    $region21: #{tpu_custom_call.1} parent=1 // pred_fallthru
      _
    // Predicated region
    $region22: #{tpu_custom_call.1} parent=1 // pred_check
      _
    $region23: #{tpu_custom_call.1} parent=1 // pred_check_branch
      %119 = sbr.rel (0) target = $region25
    $region24: #{tpu_custom_call.1} parent=1 // pred_region
      %121 = dma.done [#allocation6], 256
    $region25: #{tpu_custom_call.1} parent=1 // pred_fallthru
      _
    %122 = vsyncpa [#allocation5], 1
    %123 = vsyncpa [#allocation6], 1

</llo_original>
